<compile_context>
chip_gen: v5e
topology: v5e:2x2
jax: 0.10.0
libtpu: 0.0.40
codegen_flags: <defaults>
</compile_context>

<pallas_src>
import jax
import jax.numpy as jnp
from jax.experimental import pallas as pl
from jax.experimental.pallas import tpu as pltpu


# ----------------------------------------------------------------------------
# small helpers (kernel-side)
# ----------------------------------------------------------------------------
def _round_up(n, m):
    return ((n + m - 1) // m) * m


def _sigmoid(x):
    # exp on the EUP + approx reciprocal on the EUP -> no VALU divide.
    return pl.reciprocal(1.0 + jnp.exp(-x), approx=True)


def _row_softmax(x):
    m = jnp.max(x, axis=1, keepdims=True)
    e = jnp.exp(x - m)
    return e * pl.reciprocal(jnp.sum(e, axis=1, keepdims=True), approx=True)


# ----------------------------------------------------------------------------
# Kernel 1: once-per-sequence encoder statics (hoisted out of the decode step)
# ----------------------------------------------------------------------------
def encoder_static_kernel(enc_out_ref, mask_ref,
                          enc_wh_ref, sen_wh_w_ref, sen_wh_b_ref,
                          sen_v1_ref, sen_v2_ref,
                          et_enc_ref, au_ref, et2_ref):
    f32 = jnp.float32
    B, T, H2 = enc_out_ref.shape
    enc_flat = enc_out_ref[...].reshape(B * T, H2)           # flat MXU operand

    # W_h(h) for the temporal encoder attention (step-invariant).
    et_enc = jnp.dot(enc_flat, enc_wh_ref[...], preferred_element_type=f32)
    et_enc_ref[...] = et_enc.reshape(B, T, H2)

    # Sentiment attention: depends only on enc_out -> fully hoisted.
    et_s = jnp.tanh(jnp.dot(enc_flat, sen_wh_w_ref[...],
                            preferred_element_type=f32) + sen_wh_b_ref[...])
    et_s = et_s.reshape(B, T, H2)
    et1_s = _sigmoid(jnp.sum(et_s * sen_v1_ref[...], axis=2))         # (B, T)
    au = et1_s * mask_ref[...]
    au_ref[...] = au * pl.reciprocal(jnp.sum(au, axis=1, keepdims=True),
                                     approx=True)
    # v2 over the time axis (reference does NOT apply the padding mask here;
    # time steps beyond T contribute exactly 0 so slicing v2 to [:T] is exact).
    et2 = jnp.sum(et_s * sen_v2_ref[...][None, :, :], axis=1)         # (B, 2H)
    et2_ref[...] = _sigmoid(et2)


# ----------------------------------------------------------------------------
# Kernel 2: one decode step
# ----------------------------------------------------------------------------
def decoder_step_kernel(
    # runtime inputs
    x_t_ref, h_prev_ref, c_prev_ref, enc_out_ref, mask_ref, ct_e_ref,
    ext_vocab_ref, sum_temp_ref, prev_s_ref, et_enc_ref, et2_ref,
    # folded parameters
    gates_w_ref, gates_b_ref, fea_w_ref, fea_b_ref,
    enc_v_ref, dec_wprev_ref, dec_v_ref,
    comb_w_ref, comb_b_ref, v1_w_ref, v1_b_ref,
    # outputs
    final_ref, slab_ref,
):
    f32 = jnp.float32
    B, T, H2 = enc_out_ref.shape
    H = h_prev_ref.shape[1]
    Tp = prev_s_ref.shape[1]
    VPAD = final_ref.shape[1]
    SLABP = slab_ref.shape[1]

    x_t = x_t_ref[...]
    ct_e_in = ct_e_ref[...]
    h_prev = h_prev_ref[...]
    c_prev = c_prev_ref[...]

    # ---- LSTMCell with x_context folded into the input weights: ONE dot ----
    zin = jnp.concatenate([x_t, ct_e_in, h_prev], axis=1)        # (B, E+3H)
    gates = (jnp.dot(zin, gates_w_ref[...], preferred_element_type=f32)
             + gates_b_ref[...])
    i_g = _sigmoid(gates[:, 0 * H:1 * H])
    f_g = _sigmoid(gates[:, 1 * H:2 * H])
    g_g = jnp.tanh(gates[:, 2 * H:3 * H])
    o_g = _sigmoid(gates[:, 3 * H:4 * H])
    dec_c = f_g * c_prev + i_g * g_g
    dec_h = o_g * jnp.tanh(dec_c)

    # ---- fused W_s projections (encoder attn + intra-decoder attn): ONE dot ----
    st_hat = jnp.concatenate([dec_h, dec_c], axis=1)             # (B, 2H)
    fea = (jnp.dot(st_hat, fea_w_ref[...], preferred_element_type=f32)
           + fea_b_ref[...])                                     # (B, 3H)
    dec_fea_e = fea[:, :H2]                                      # (B, 2H)
    dec_fea_d = fea[:, H2:]                                      # (B, H)

    enc_out = enc_out_ref[...]
    mask = mask_ref[...]

    # ---- temporal encoder attention (W_h(enc_out) precomputed) ----
    et3 = jnp.tanh(et_enc_ref[...] + dec_fea_e[:, None, :])      # (B, T, 2H)
    et = jnp.sum(et3 * enc_v_ref[...], axis=2)                   # v(et) -> (B, T)
    exp_et = jnp.exp(et)
    sum_temp = sum_temp_ref[...]
    et1 = exp_et * pl.reciprocal(sum_temp, approx=True)
    sum_temp_new = sum_temp + exp_et
    at = et1 * mask
    at = at * pl.reciprocal(jnp.sum(at, axis=1, keepdims=True), approx=True)
    ct_e = jnp.einsum('bqt,bth->bqh', at[:, None, :], enc_out,
                      preferred_element_type=f32)[:, 0, :]        # (B, 2H)

    # ---- intra-decoder attention ----
    prev_s = prev_s_ref[...]                                      # (B, Tp, H)
    etd3 = jnp.dot(prev_s.reshape(B * Tp, H), dec_wprev_ref[...],
                   preferred_element_type=f32).reshape(B, Tp, H)
    etd3 = jnp.tanh(etd3 + dec_fea_d[:, None, :])
    etd = jnp.sum(etd3 * dec_v_ref[...], axis=2)                  # (B, Tp)
    atd = _row_softmax(etd)
    ct_d = jnp.einsum('bqt,bth->bqh', atd[:, None, :], prev_s,
                      preferred_element_type=f32)[:, 0, :]        # (B, H)

    # ---- fused V(.) projection + all four p_gen heads: ONE dot ----
    feat = jnp.concatenate([dec_h, dec_c, ct_e, ct_d, et2_ref[...]], axis=1)
    proj = (jnp.dot(feat, comb_w_ref[...], preferred_element_type=f32)
            + comb_b_ref[...])                                    # (B, H+1)
    h_out = proj[:, :H]
    p_gen = _sigmoid(proj[:, H:H + 1])                            # (B, 1)

    # ---- vocab distribution over 128-lane-padded width ----
    # padded columns carry bias -1e30 -> exp underflows to exactly 0.
    logits = (jnp.dot(h_out, v1_w_ref[...], preferred_element_type=f32)
              + v1_b_ref[...])                                    # (B, VPAD)
    m = jnp.max(logits, axis=1, keepdims=True)
    e = jnp.exp(logits - m)
    vocab_dist = (p_gen * pl.reciprocal(jnp.sum(e, axis=1, keepdims=True),
                                        approx=True)) * e

    # ---- pointer scatter_add as a one-hot MXU contraction ----
    attn_w = (1.0 - p_gen) * at                                   # (B, T)
    idx = ext_vocab_ref[...]                                      # (B, T) int32
    col = jax.lax.broadcasted_iota(jnp.int32, (B, T, VPAD), 2)
    onehot = (idx[:, :, None] == col).astype(f32)
    scat = jnp.einsum('bqt,btv->bqv', attn_w[:, None, :], onehot,
                      preferred_element_type=f32)[:, 0, :]        # (B, VPAD)

    # single unmasked, 128-lane-dense store (extra_zeros add was dead work)
    final_ref[...] = vocab_dist + scat

    # ---- pack all small per-step outputs into one lane-dense slab ----
    pad = jnp.zeros((B, SLABP - (4 * H + T)), f32)
    slab_ref[...] = jnp.concatenate([dec_h, dec_c, ct_e, sum_temp_new, pad],
                                    axis=1)


# ----------------------------------------------------------------------------
# parameter construction + one-time folding (wrapper side)
# ----------------------------------------------------------------------------
def init_params(key, H, E, V, max_enc_steps):
    keys = iter(jax.random.split(key, 30))

    def nrm(shape, std=0.05):
        return (std * jax.random.normal(next(keys), shape)).astype(jnp.float32)

    def unif(shape, mag=0.02):
        return (mag * (2.0 * jax.random.uniform(next(keys), shape) - 1.0)
                ).astype(jnp.float32)

    p = {}
    p['xc_w'] = nrm((E + 2 * H, E))
    p['xc_b'] = nrm((1, E))
    # LSTMCell (init_lstm_wt): uniform weights, zero biases except forget gate
    # (bias_ih + bias_hh -> 2.0).
    p['lstm_wih'] = unif((E, 4 * H))
    p['lstm_whh'] = unif((H, 4 * H))
    p['lstm_b'] = jnp.zeros((1, 4 * H), jnp.float32).at[:, H:2 * H].set(2.0)
    # encoder attention
    p['enc_Wh_w'] = nrm((2 * H, 2 * H))
    p['enc_Ws_w'] = nrm((2 * H, 2 * H))
    p['enc_Ws_b'] = nrm((1, 2 * H))
    p['enc_v_w'] = nrm((1, 2 * H))
    # sentiment attention
    p['sen_Wh_w'] = nrm((2 * H, 2 * H))
    p['sen_Wh_b'] = nrm((1, 2 * H))
    p['sen_v1_w'] = nrm((1, 2 * H))
    p['sen_v2_w'] = nrm((max_enc_steps, 1))
    # intra-decoder attention
    p['dec_Wprev_w'] = nrm((H, H))
    p['dec_Ws_w'] = nrm((H, H))
    p['dec_Ws_b'] = nrm((1, H))
    p['dec_v_w'] = nrm((1, H))
    # p_gen heads
    p['pgen_emo_w'] = nrm((1, 2 * H))
    p['pgen_cte_w'] = nrm((1, 2 * H))
    p['pgen_ctd_w'] = nrm((1, H))
    p['pgen_st_w'] = nrm((1, 2 * H))
    p['pgen_st_b'] = nrm((1, 1))
    # output projections
    p['V_w'] = nrm((6 * H, H))
    p['V_b'] = nrm((1, H))
    p['V1_w'] = nrm((H, V), std=1e-2)
    p['V1_b'] = nrm((1, V), std=1e-2)
    return p


def _fold_params(params, E, H, T, V, VPAD):
    """One-time (per model) weight folding done outside the kernel."""
    f32 = jnp.float32
    xc_w, xc_b = params['xc_w'], params['xc_b']
    wih, whh, lb = params['lstm_wih'], params['lstm_whh'], params['lstm_b']

    # x_context folded into the LSTM input weights:
    #   gates = [x_t, ct_e, h_prev] @ gates_w + gates_b
    gates_w = jnp.concatenate([xc_w[:E] @ wih, xc_w[E:] @ wih, whh], axis=0)
    gates_b = xc_b @ wih + lb

    # fused W_s for encoder attention (input [dec_h, dec_c]) and
    # intra-decoder attention (input dec_h only -> zero rows for dec_c).
    dec_ws_pad = jnp.concatenate([params['dec_Ws_w'], jnp.zeros((H, H), f32)],
                                 axis=0)                          # (2H, H)
    fea_w = jnp.concatenate([params['enc_Ws_w'], dec_ws_pad], axis=1)  # (2H, 3H)
    fea_b = jnp.concatenate([params['enc_Ws_b'], params['dec_Ws_b']], axis=1)

    # fused V(.) + p_gen over feat = [dec_h, dec_c, ct_e, ct_d, et2] (7H wide)
    V_w = params['V_w']   # rows ordered per torch cat: [dec_h, ct_e, ct_d, et2]
    v_rows = jnp.concatenate(
        [V_w[0:H], jnp.zeros((H, H), f32), V_w[H:3 * H],
         V_w[3 * H:4 * H], V_w[4 * H:6 * H]], axis=0)             # (7H, H)
    pg_col = jnp.concatenate(
        [params['pgen_st_w'][:, :H].T, params['pgen_st_w'][:, H:].T,
         params['pgen_cte_w'].T, params['pgen_ctd_w'].T,
         params['pgen_emo_w'].T], axis=0)                         # (7H, 1)
    comb_w = jnp.concatenate([v_rows, pg_col], axis=1)            # (7H, H+1)
    comb_b = jnp.concatenate([params['V_b'], params['pgen_st_b']], axis=1)

    # V1 padded to a lane-dense width; padded columns get a -1e30 bias so they
    # carry exactly zero softmax mass.
    v1_w_pad = jnp.zeros((H, VPAD), f32).at[:, :V].set(params['V1_w'])
    v1_b_pad = jnp.full((1, VPAD), -1e30, f32).at[:, :V].set(params['V1_b'])

    return dict(gates_w=gates_w, gates_b=gates_b, fea_w=fea_w, fea_b=fea_b,
                comb_w=comb_w, comb_b=comb_b,
                v1_w_pad=v1_w_pad, v1_b_pad=v1_b_pad,
                sen_v2=params['sen_v2_w'][:T])


def _pad_batch(x, bp):
    b = x.shape[0]
    if b == bp:
        return x
    pad = [(0, bp - b)] + [(0, 0)] * (x.ndim - 1)
    return jnp.pad(x, pad, mode='edge')   # replicate rows; rows are independent


# ----------------------------------------------------------------------------
# forward wrapper
# ----------------------------------------------------------------------------
def decoder_forward(params, x_t, s_t, enc_out, enc_padding_mask, ct_e,
                    extra_zeros, enc_batch_extend_vocab, sum_temporal_srcs,
                    prev_s):
    h_prev, c_prev = s_t
    B, E = x_t.shape
    H = h_prev.shape[1]
    T = enc_out.shape[1]
    V = params['V1_b'].shape[1]
    n_extra = 0 if extra_zeros is None else extra_zeros.shape[1]
    Vext = V + n_extra
    VPAD = _round_up(Vext, 128)
    SLABP = _round_up(4 * H + T, 128)
    BP = _round_up(B, 8)           # pad batch to full sublanes

    folded = _fold_params(params, E, H, T, V, VPAD)
    vm = pl.BlockSpec(memory_space=pltpu.MemorySpace.VMEM)
    pb = lambda a: _pad_batch(a, BP)

    enc_out_p = pb(enc_out)
    mask_p = pb(enc_padding_mask)

    # --- once-per-sequence statics (hoisted W_h(enc_out) + sentiment branch) ---
    static_in = [enc_out_p, mask_p, params['enc_Wh_w'], params['sen_Wh_w'],
                 params['sen_Wh_b'], params['sen_v1_w'], folded['sen_v2']]
    et_enc, au_p, et2_p = pl.pallas_call(
        encoder_static_kernel,
        out_shape=(jax.ShapeDtypeStruct((BP, T, 2 * H), jnp.float32),
                   jax.ShapeDtypeStruct((BP, T), jnp.float32),
                   jax.ShapeDtypeStruct((BP, 2 * H), jnp.float32)),
        in_specs=[vm] * len(static_in),
        out_specs=(vm, vm, vm),
    )(*static_in)

    # --- one decode step ---
    step_in = [pb(x_t), pb(h_prev), pb(c_prev), enc_out_p, mask_p, pb(ct_e),
               pb(enc_batch_extend_vocab), pb(sum_temporal_srcs), pb(prev_s),
               et_enc, et2_p,
               folded['gates_w'], folded['gates_b'],
               folded['fea_w'], folded['fea_b'],
               params['enc_v_w'], params['dec_Wprev_w'], params['dec_v_w'],
               folded['comb_w'], folded['comb_b'],
               folded['v1_w_pad'], folded['v1_b_pad']]
    final_pad, slab = pl.pallas_call(
        decoder_step_kernel,
        out_shape=(jax.ShapeDtypeStruct((BP, VPAD), jnp.float32),
                   jax.ShapeDtypeStruct((BP, SLABP), jnp.float32)),
        in_specs=[vm] * len(step_in),
        out_specs=(vm, vm),
    )(*step_in)

    # unpack (drop the batch / lane padding)
    final_dist = final_pad[:B, :Vext]
    dec_h = slab[:B, 0:H]
    dec_c = slab[:B, H:2 * H]
    ct_e_new = slab[:B, 2 * H:4 * H]
    sum_temp_new = slab[:B, 4 * H:4 * H + T]
    au = au_p[:B]
    et2 = et2_p[:B]
    prev_s_new = jnp.concatenate([prev_s, dec_h[:, None, :]], axis=1)
    return final_dist, (dec_h, dec_c), ct_e_new, au, et2, sum_temp_new, prev_s_new


if __name__ == "__main__":
    # config_word2vec (small, synthetic): hidden_dim=H, emb_dim=E,
    # vocab_size=V, max_enc_steps=T, intra_encoder=True, intra_decoder=True
    B, E, H, T, Tp = 2, 32, 32, 8, 3
    V, n_extra = 64, 8
    MAX_ENC_STEPS = T

    key = jax.random.PRNGKey(0)
    kp, kd = jax.random.split(key)
    params = init_params(kp, H, E, V, MAX_ENC_STEPS)

    ks = jax.random.split(kd, 8)
    x_t = jax.random.normal(ks[0], (B, E), jnp.float32)
    h0 = jax.random.normal(ks[1], (B, H), jnp.float32)
    c0 = jax.random.normal(ks[2], (B, H), jnp.float32)
    enc_out = jax.random.normal(ks[3], (B, T, 2 * H), jnp.float32)
    enc_padding_mask = jnp.ones((B, T), jnp.float32).at[1, T - 2:].set(0.0)
    ct_e0 = jax.random.normal(ks[4], (B, 2 * H), jnp.float32)
    extra_zeros = jnp.zeros((B, n_extra), jnp.float32)
    enc_batch_extend_vocab = jax.random.randint(ks[5], (B, T), 0, V + n_extra,
                                                jnp.int32)
    sum_temporal_srcs = jax.random.uniform(ks[6], (B, T), jnp.float32, 0.5, 1.5)
    prev_s = jax.random.normal(ks[7], (B, Tp, H), jnp.float32)

    outs = decoder_forward(params, x_t, (h0, c0), enc_out, enc_padding_mask,
                           ct_e0, extra_zeros, enc_batch_extend_vocab,
                           sum_temporal_srcs, prev_s)
    outs = jax.block_until_ready(outs)
    final_dist, (dec_h, dec_c), ct_e_new, au, et2, sum_temp_new, prev_s_new = outs

    # sanity: final_dist is a probability distribution over the extended vocab
    assert final_dist.shape == (B, V + n_extra)
    assert dec_h.shape == (B, H) and dec_c.shape == (B, H)
    assert ct_e_new.shape == (B, 2 * H) and et2.shape == (B, 2 * H)
    assert au.shape == (B, T) and sum_temp_new.shape == (B, T)
    assert prev_s_new.shape == (B, Tp + 1, H)
    assert bool(jnp.all(jnp.isfinite(final_dist)))
    # approx reciprocals (EUP) leave ~1e-4 relative error on the normalizations
    assert bool(jnp.allclose(jnp.sum(final_dist, axis=1), 1.0, atol=5e-3))
    print("KERNEL_OK")
</pallas_src>

<mosaic_0001>
module attributes {stable_mosaic.version = 11 : i64} {
  func.func @encoder_static_kernel(%arg0: memref<8x8x64xf32, #tpu.memory_space<vmem>>, %arg1: memref<8x8xf32, #tpu.memory_space<vmem>>, %arg2: memref<64x64xf32, #tpu.memory_space<vmem>>, %arg3: memref<64x64xf32, #tpu.memory_space<vmem>>, %arg4: memref<1x64xf32, #tpu.memory_space<vmem>>, %arg5: memref<1x64xf32, #tpu.memory_space<vmem>>, %arg6: memref<8x1xf32, #tpu.memory_space<vmem>>, %arg7: memref<8x8x64xf32, #tpu.memory_space<vmem>>, %arg8: memref<8x8xf32, #tpu.memory_space<vmem>>, %arg9: memref<8x64xf32, #tpu.memory_space<vmem>>) attributes {dimension_semantics = [], scalar_prefetch = 0 : i64, scratch_operands = 0 : i64, tpu.core_type = #tpu.core_type<tc>} {
    %c0 = arith.constant 0 : index
    %c0_0 = arith.constant 0 : index
    %c0_1 = arith.constant 0 : index
    %0 = vector.load %arg0[%c0, %c0_0, %c0_1] : memref<8x8x64xf32, #tpu.memory_space<vmem>>, vector<8x8x64xf32>
    %1 = vector.shape_cast %0 : vector<8x8x64xf32> to vector<64x64xf32>
    %c0_2 = arith.constant 0 : index
    %c0_3 = arith.constant 0 : index
    %2 = vector.load %arg2[%c0_2, %c0_3] : memref<64x64xf32, #tpu.memory_space<vmem>>, vector<64x64xf32>
    %cst = arith.constant dense<0.000000e+00> : vector<64x64xf32>
    %3 = tpu.matmul %1, %2, %cst {dimension_numbers = #tpu.dot_dimension_numbers<[1], [0], [0], [1], [0, 0, 1, 1], [], []>} : vector<64x64xf32>, vector<64x64xf32>, vector<64x64xf32> -> vector<64x64xf32>
    %4 = vector.shape_cast %3 : vector<64x64xf32> to vector<8x8x64xf32>
    %c0_4 = arith.constant 0 : index
    %c0_5 = arith.constant 0 : index
    %c0_6 = arith.constant 0 : index
    %5 = vector.load %arg7[%c0_4, %c0_5, %c0_6] : memref<8x8x64xf32, #tpu.memory_space<vmem>>, vector<8x8x64xf32>
    tpu.vector_store %arg7[%c0_4, %c0_5, %c0_6], %4 {strides = array<i32>} : memref<8x8x64xf32, #tpu.memory_space<vmem>>, vector<8x8x64xf32>,
    %c0_7 = arith.constant 0 : index
    %c0_8 = arith.constant 0 : index
    %6 = vector.load %arg3[%c0_7, %c0_8] : memref<64x64xf32, #tpu.memory_space<vmem>>, vector<64x64xf32>
    %cst_9 = arith.constant dense<0.000000e+00> : vector<64x64xf32>
    %7 = tpu.matmul %1, %6, %cst_9 {dimension_numbers = #tpu.dot_dimension_numbers<[1], [0], [0], [1], [0, 0, 1, 1], [], []>} : vector<64x64xf32>, vector<64x64xf32>, vector<64x64xf32> -> vector<64x64xf32>
    %c0_10 = arith.constant 0 : index
    %c0_11 = arith.constant 0 : index
    %8 = vector.load %arg4[%c0_10, %c0_11] : memref<1x64xf32, #tpu.memory_space<vmem>>, vector<1x64xf32>
    %9 = vector.broadcast %8 : vector<1x64xf32> to vector<64x64xf32>
    %10 = arith.addf %7, %9 : vector<64x64xf32>
    %11 = math.tanh %10 : vector<64x64xf32>
    %12 = vector.shape_cast %11 : vector<64x64xf32> to vector<8x8x64xf32>
    %c0_12 = arith.constant 0 : index
    %c0_13 = arith.constant 0 : index
    %13 = vector.load %arg5[%c0_12, %c0_13] : memref<1x64xf32, #tpu.memory_space<vmem>>, vector<1x64xf32>
    %14 = vector.shape_cast %13 : vector<1x64xf32> to vector<1x1x64xf32>
    %15 = vector.broadcast %14 : vector<1x1x64xf32> to vector<8x8x64xf32>
    %16 = arith.mulf %12, %15 : vector<8x8x64xf32>
    %cst_14 = arith.constant dense<0.000000e+00> : vector<8x8xf32>
    %17 = vector.multi_reduction <add>, %16, %cst_14 [2] : vector<8x8x64xf32> to vector<8x8xf32>
    %cst_15 = arith.constant 0.000000e+00 : f32
    %18 = vector.broadcast %cst_15 : f32 to vector<8x8xf32>
    %19 = arith.subf %18, %17 : vector<8x8xf32>
    %20 = math.exp %19 : vector<8x8xf32>
    %cst_16 = arith.constant 1.000000e+00 : f32
    %21 = vector.broadcast %cst_16 : f32 to vector<8x8xf32>
    %22 = arith.addf %21, %20 : vector<8x8xf32>
    %23 = tpu.reciprocal %22 {approx = true} : vector<8x8xf32> -> vector<8x8xf32>
    %c0_17 = arith.constant 0 : index
    %c0_18 = arith.constant 0 : index
    %24 = vector.load %arg1[%c0_17, %c0_18] : memref<8x8xf32, #tpu.memory_space<vmem>>, vector<8x8xf32>
    %25 = arith.mulf %23, %24 : vector<8x8xf32>
    %cst_19 = arith.constant dense<0.000000e+00> : vector<8xf32>
    %26 = vector.multi_reduction <add>, %25, %cst_19 [1] : vector<8x8xf32> to vector<8xf32>
    %27 = vector.shape_cast %26 : vector<8xf32> to vector<8x1xf32>
    %28 = tpu.reciprocal %27 {approx = true} : vector<8x1xf32> -> vector<8x1xf32>
    %29 = vector.broadcast %28 : vector<8x1xf32> to vector<8x8xf32>
    %30 = arith.mulf %25, %29 : vector<8x8xf32>
    %c0_20 = arith.constant 0 : index
    %c0_21 = arith.constant 0 : index
    %31 = vector.load %arg8[%c0_20, %c0_21] : memref<8x8xf32, #tpu.memory_space<vmem>>, vector<8x8xf32>
    tpu.vector_store %arg8[%c0_20, %c0_21], %30 {strides = array<i32>} : memref<8x8xf32, #tpu.memory_space<vmem>>, vector<8x8xf32>,
    %c0_22 = arith.constant 0 : index
    %c0_23 = arith.constant 0 : index
    %32 = vector.load %arg6[%c0_22, %c0_23] : memref<8x1xf32, #tpu.memory_space<vmem>>, vector<8x1xf32>
    %33 = vector.shape_cast %32 : vector<8x1xf32> to vector<1x8x1xf32>
    %34 = vector.broadcast %33 : vector<1x8x1xf32> to vector<8x8x64xf32>
    %35 = arith.mulf %12, %34 : vector<8x8x64xf32>
    %cst_24 = arith.constant dense<0.000000e+00> : vector<8x64xf32>
    %36 = vector.multi_reduction <add>, %35, %cst_24 [1] : vector<8x8x64xf32> to vector<8x64xf32>
    %cst_25 = arith.constant 0.000000e+00 : f32
    %37 = vector.broadcast %cst_25 : f32 to vector<8x64xf32>
    %38 = arith.subf %37, %36 : vector<8x64xf32>
    %39 = math.exp %38 : vector<8x64xf32>
    %cst_26 = arith.constant 1.000000e+00 : f32
    %40 = vector.broadcast %cst_26 : f32 to vector<8x64xf32>
    %41 = arith.addf %40, %39 : vector<8x64xf32>
    %42 = tpu.reciprocal %41 {approx = true} : vector<8x64xf32> -> vector<8x64xf32>
    %c0_27 = arith.constant 0 : index
    %c0_28 = arith.constant 0 : index
    %43 = vector.load %arg9[%c0_27, %c0_28] : memref<8x64xf32, #tpu.memory_space<vmem>>, vector<8x64xf32>
    tpu.vector_store %arg9[%c0_27, %c0_28], %42 {strides = array<i32>} : memref<8x64xf32, #tpu.memory_space<vmem>>, vector<8x64xf32>,
    return
  }
}

</mosaic_0001>

<llo_original>
// kernel: tpu_custom_call.1
$region0: #{tpu_custom_call.1}
  #allocation0 [shape = 'u32[]', space=smem, size = 0x4, offset = 0x4, fixed_abs, tag = 'smem constant byte address 0x4 - core index']
  #allocation1 [shape = 'u32[72,128]{1,0:T(1,128)}', space=vmem, size = 0x9000, scoped, tag = 'internal scratch']
  %s0 = inlined_call_operand.hbm [shape: f32[8,8,64], index: 0, kind: input, shape index: {}]
  %s1 = inlined_call_operand.vmem [shape: f32[8,8], index: 1, kind: input, shape index: {}]
  %s2 = inlined_call_operand.hbm [shape: f32[64,64], index: 2, kind: input, shape index: {}]
  %s3 = inlined_call_operand.hbm [shape: f32[64,64], index: 3, kind: input, shape index: {}]
  %s4 = inlined_call_operand.vmem [shape: f32[1,64], index: 4, kind: input, shape index: {}]
  %s5 = inlined_call_operand.vmem [shape: f32[1,64], index: 5, kind: input, shape index: {}]
  %s6 = inlined_call_operand.vmem [shape: f32[8,1], index: 6, kind: input, shape index: {}]
  %s7 = inlined_call_operand.hbm [shape: f32[8,8,64], index: 7, kind: output, shape index: {0}]
  %s8 = inlined_call_operand.hbm [shape: f32[8,8], index: 8, kind: output, shape index: {1}]
  %s9 = inlined_call_operand.hbm [shape: f32[8,64], index: 9, kind: output, shape index: {2}]
  %10 = xla_tuple %s7, %s8, %s9
  %s11 = sld [smem:[#allocation0]]
  $region66: #{tpu_custom_call.1} parent=0
    _
  %s13 = ssub.s32 1, %s11
  %s14 = scalar_select 0, %s13, %s11
  $region1: #{tpu_custom_call.1} parent=0
    #allocation2 [shape = 'u8[32768]{0}', space=vmem, size = 0x8000, scoped, tag = 'input window, operand 0, single buffered']
    #allocation3 [shape = 's32[1]{0}', space=sflag, size = 0x4, scoped, tag = 'scoped memory for tpu_custom_call.1']
    #allocation4 [shape = 's32[1]{0}', space=sflag, size = 0x4, scoped, tag = 'scoped memory for tpu_custom_call.1']
    #allocation5 [shape = 'u8[32768]{0}', space=vmem, size = 0x8000, scoped, tag = 'input window, operand 2, single buffered']
    #allocation6 [shape = 's32[1]{0}', space=sflag, size = 0x4, scoped, tag = 'scoped memory for tpu_custom_call.1']
    #allocation7 [shape = 'u8[32768]{0}', space=vmem, size = 0x8000, scoped, tag = 'input window, operand 3, single buffered']
    #allocation8 [shape = 'u8[32768]{0}', space=vmem, size = 0x8000, scoped, tag = 'output window, operand 0, single buffered']
    #allocation9 [shape = 'u8[4096]{0}', space=vmem, size = 0x1000, scoped, tag = 'output window, operand 1, single buffered']
    #allocation10 [shape = 's32[1]{0}', space=sflag, size = 0x4, scoped, tag = 'scoped memory for tpu_custom_call.1']
    #allocation11 [shape = 'u8[4096]{0}', space=vmem, size = 0x1000, scoped, tag = 'output window, operand 2, single buffered']
    %15 = vsyncpa [#allocation3], 0
    %16 = vsyncpa [#allocation6], 0
    %17 = vsyncpa [#allocation4], 0
    %18 = vsyncpa [#allocation10], 0
    // Predicated region
    $region2: #{tpu_custom_call.1} parent=1 // pred_check
      _
    $region3: #{tpu_custom_call.1} parent=1 // pred_check_branch
      %20 = sbr.rel (0) target = $region5
    $region4: #{tpu_custom_call.1} parent=1 // pred_region
      %22 = vsyncadd [#allocation3], 0
      %s23 = sshll.u32 %s0, 4
      %s24 = int_to_ptr.hbm [resolvable:$true] %s23
      %s25 = sshll.u32 [#allocation2], 4
      %s26 = int_to_ptr.vmem [resolvable:$true] %s25
      %31 = dma.hbm_to_vmem [thread:$0]  %s24, 1024, %s26, [#allocation3], 128, 128, 8
    $region5: #{tpu_custom_call.1} parent=1 // pred_fallthru
      _
    // Predicated region
    $region6: #{tpu_custom_call.1} parent=1 // pred_check
      _
    $region7: #{tpu_custom_call.1} parent=1 // pred_check_branch
      %33 = sbr.rel (0) target = $region9
    $region8: #{tpu_custom_call.1} parent=1 // pred_region
      _
    $region9: #{tpu_custom_call.1} parent=1 // pred_fallthru
      _
    // Predicated region
    $region10: #{tpu_custom_call.1} parent=1 // pred_check
      _
    $region11: #{tpu_custom_call.1} parent=1 // pred_check_branch
      %35 = sbr.rel (0) target = $region13
    $region12: #{tpu_custom_call.1} parent=1 // pred_region
      %37 = vsyncadd [#allocation6], 0
      %s38 = sshll.u32 %s2, 4
      %s39 = int_to_ptr.hbm [resolvable:$true] %s38
      %s40 = sshll.u32 [#allocation5], 4
      %s41 = int_to_ptr.vmem [resolvable:$true] %s40
      %46 = dma.hbm_to_vmem [thread:$0]  %s39, 1024, %s41, [#allocation6], 128, 128, 8
    $region13: #{tpu_custom_call.1} parent=1 // pred_fallthru
      _
    // Predicated region
    $region14: #{tpu_custom_call.1} parent=1 // pred_check
      _
    $region15: #{tpu_custom_call.1} parent=1 // pred_check_branch
      %48 = sbr.rel (0) target = $region17
    $region16: #{tpu_custom_call.1} parent=1 // pred_region
      %50 = vsyncadd [#allocation6], 0
      %s51 = sshll.u32 %s3, 4
      %s52 = int_to_ptr.hbm [resolvable:$true] %s51
      %s53 = sshll.u32 [#allocation7], 4
      %s54 = int_to_ptr.vmem [resolvable:$true] %s53
      %59 = dma.hbm_to_vmem [thread:$0]  %s52, 1024, %s54, [#allocation6], 128, 128, 8
    $region17: #{tpu_custom_call.1} parent=1 // pred_fallthru
      _
    // Predicated region
    $region18: #{tpu_custom_call.1} parent=1 // pred_check
      _
    $region19: #{tpu_custom_call.1} parent=1 // pred_check_branch
      %61 = sbr.rel (0) target = $region21
    $region20: #{tpu_custom_call.1} parent=1 // pred_region
      _
    $region21: #{tpu_custom_call.1} parent=1 // pred_fallthru
      _
    // Predicated region
    $region22: #{tpu_custom_call.1} parent=1 // pred_check
      _
    $region23: #{tpu_custom_call.1} parent=1 // pred_check_branch
      %63 = sbr.rel (0) target = $region25
    $region24: #{tpu_custom_call.1} parent=1 // pred_region
      _
    $region25: #{tpu_custom_call.1} parent=1 // pred_fallthru
      _
    // Predicated region
    $region26: #{tpu_custom_call.1} parent=1 // pred_check
      _
    $region27: #{tpu_custom_call.1} parent=1 // pred_check_branch
      %65 = sbr.rel (0) target = $region29
    $region28: #{tpu_custom_call.1} parent=1 // pred_region
      _
    $region29: #{tpu_custom_call.1} parent=1 // pred_fallthru
      _
    // Predicated region
    $region30: #{tpu_custom_call.1} parent=1 // pred_check
      _
    $region31: #{tpu_custom_call.1} parent=1 // pred_check_branch
      %67 = sbr.rel (0) target = $region33
    $region32: #{tpu_custom_call.1} parent=1 // pred_region
      %69 = dma.done [#allocation3], 1024
    $region33: #{tpu_custom_call.1} parent=1 // pred_fallthru
      _
    // Predicated region
    $region34: #{tpu_custom_call.1} parent=1 // pred_check
      _
    $region35: #{tpu_custom_call.1} parent=1 // pred_check_branch
      %71 = sbr.rel (0) target = $region37
    $region36: #{tpu_custom_call.1} parent=1 // pred_region
      %73 = dma.done [#allocation6], 1024
    $region37: #{tpu_custom_call.1} parent=1 // pred_fallthru
      _
    // Predicated region
    $region38: #{tpu_custom_call.1} parent=1 // pred_check
      _
    $region39: #{tpu_custom_call.1} parent=1 // pred_check_branch
      %75 = sbr.rel (0) target = $region41
    $region40: #{tpu_custom_call.1} parent=1 // pred_region
      %77 = dma.done [#allocation6], 1024
    $region41: #{tpu_custom_call.1} parent=1 // pred_fallthru
      _
    %v78 = vld [vmem:[#allocation2] sm:$0xff]
    %v79 = vld [vmem:[#allocation2 + $0x8] sm:$0xff]
    %v80 = vld [vmem:[#allocation2 + $0x10] sm:$0xff]
    %v81 = vld [vmem:[#allocation2 + $0x18] sm:$0xff]
    %v82 = vld [vmem:[#allocation2 + $0x20] sm:$0xff]
    %v83 = vld [vmem:[#allocation2 + $0x28] sm:$0xff]
    %v84 = vld [vmem:[#allocation2 + $0x30] sm:$0xff]
    %v85 = vld [vmem:[#allocation2 + $0x38] sm:$0xff]
    %v86 = vld [vmem:[#allocation5] sm:$0xff]
    %v87 = vld [vmem:[#allocation5 + $0x8] sm:$0xff]
    %v88 = vld [vmem:[#allocation5 + $0x10] sm:$0xff]
    %v89 = vld [vmem:[#allocation5 + $0x18] sm:$0xff]
    %v90 = vld [vmem:[#allocation5 + $0x20] sm:$0xff]
    %v91 = vld [vmem:[#allocation5 + $0x28] sm:$0xff]
    %v92 = vld [vmem:[#allocation5 + $0x30] sm:$0xff]
    %v93 = vld [vmem:[#allocation5 + $0x38] sm:$0xff]
    %vm94 = vcmask 523264
    %v96 = vsel %vm94, %v78, 0
    %v99 = vsel %vm94, %v79, 0
    %v102 = vsel %vm94, %v80, 0
    %v105 = vsel %vm94, %v81, 0
    %v108 = vsel %vm94, %v82, 0
    %v111 = vsel %vm94, %v83, 0
    %v114 = vsel %vm94, %v84, 0
    %v117 = vsel %vm94, %v85, 0
    %119 = vmatpush.msra.mxu0 0.0
    %120 = vmatpush.msra.mxu0 0.0
    %121 = vmatpush.msra.mxu0 0.0
    %122 = vmatpush.msra.mxu0 0.0
    %123 = vmatpush.msra.mxu0 0.0
    %124 = vmatpush.msra.mxu0 0.0
    %125 = vmatpush.msra.mxu0 0.0
    %126 = vmatpush.msra.mxu0 0.0
    %127 = vmatpush.msra.mxu0 %v93
    %128 = vmatpush.msra.mxu0 %v92
    %129 = vmatpush.msra.mxu0 %v91
    %130 = vmatpush.msra.mxu0 %v90
    %131 = vmatpush.msra.mxu0 %v89
    %132 = vmatpush.msra.mxu0 %v88
    %133 = vmatpush.msra.mxu0 %v87
    %134 = vmatpush.msra.mxu0 %v86
    %135 = vmatmul.f32.gmra.mxu0 %v96
    %v136 = vpop.f32.mrf.mxu0
    %v137 = vadd.f32 0.0, %v136
    %138 = vmatmul.f32.gmra.mxu0 %v99
    %v139 = vpop.f32.mrf.mxu0
    %v140 = vadd.f32 0.0, %v139
    %141 = vmatmul.f32.gmra.mxu0 %v102
    %v142 = vpop.f32.mrf.mxu0
    %v143 = vadd.f32 0.0, %v142
    %144 = vmatmul.f32.gmra.mxu0 %v105
    %v145 = vpop.f32.mrf.mxu0
    %v146 = vadd.f32 0.0, %v145
    %147 = vmatmul.f32.gmra.mxu0 %v108
    %v148 = vpop.f32.mrf.mxu0
    %v149 = vadd.f32 0.0, %v148
    %150 = vmatmul.f32.gmra.mxu0 %v111
    %v151 = vpop.f32.mrf.mxu0
    %v152 = vadd.f32 0.0, %v151
    %153 = vmatmul.f32.gmra.mxu0 %v114
    %v154 = vpop.f32.mrf.mxu0
    %v155 = vadd.f32 0.0, %v154
    %156 = vmatmul.f32.gmra.mxu0 %v117
    %v157 = vpop.f32.mrf.mxu0
    %v158 = vadd.f32 0.0, %v157
    %159 = vdwg.mxu0
    %160 = vst.msk [vmem:[#allocation8] sm:$0xff] %vm94, %v137
    %161 = vst.msk [vmem:[#allocation8 + $0x8] sm:$0xff] %vm94, %v140
    %162 = vst.msk [vmem:[#allocation8 + $0x10] sm:$0xff] %vm94, %v143
    %163 = vst.msk [vmem:[#allocation8 + $0x18] sm:$0xff] %vm94, %v146
    %164 = vst.msk [vmem:[#allocation8 + $0x20] sm:$0xff] %vm94, %v149
    %165 = vst.msk [vmem:[#allocation8 + $0x28] sm:$0xff] %vm94, %v152
    %166 = vst.msk [vmem:[#allocation8 + $0x30] sm:$0xff] %vm94, %v155
    %167 = vst.msk [vmem:[#allocation8 + $0x38] sm:$0xff] %vm94, %v158
    %v168 = vld [vmem:[#allocation7] sm:$0xff]
    %v169 = vld [vmem:[#allocation7 + $0x8] sm:$0xff]
    %v170 = vld [vmem:[#allocation7 + $0x10] sm:$0xff]
    %v171 = vld [vmem:[#allocation7 + $0x18] sm:$0xff]
    %v172 = vld [vmem:[#allocation7 + $0x20] sm:$0xff]
    %v173 = vld [vmem:[#allocation7 + $0x28] sm:$0xff]
    %v174 = vld [vmem:[#allocation7 + $0x30] sm:$0xff]
    %v175 = vld [vmem:[#allocation7 + $0x38] sm:$0xff]
    %v176 = vld [vmem:[%s4] sm:$0x1]
    %v178 = vperm.slane %v176, 0
    %180 = vmatpush.msra.mxu0 0.0
    %181 = vmatpush.msra.mxu0 0.0
    %182 = vmatpush.msra.mxu0 0.0
    %183 = vmatpush.msra.mxu0 0.0
    %184 = vmatpush.msra.mxu0 0.0
    %185 = vmatpush.msra.mxu0 0.0
    %186 = vmatpush.msra.mxu0 0.0
    %187 = vmatpush.msra.mxu0 0.0
    %188 = vmatpush.msra.mxu0 %v175
    %189 = vmatpush.msra.mxu0 %v174
    %190 = vmatpush.msra.mxu0 %v173
    %191 = vmatpush.msra.mxu0 %v172
    %192 = vmatpush.msra.mxu0 %v171
    %193 = vmatpush.msra.mxu0 %v170
    %194 = vmatpush.msra.mxu0 %v169
    %195 = vmatpush.msra.mxu0 %v168
    %196 = vmatmul.f32.gmra.mxu0 %v96
    %v197 = vpop.f32.mrf.mxu0
    %v198 = vadd.f32 %v178, %v197
    %199 = vmatmul.f32.gmra.mxu0 %v99
    %v200 = vpop.f32.mrf.mxu0
    %v201 = vadd.f32 %v178, %v200
    %202 = vmatmul.f32.gmra.mxu0 %v102
    %v203 = vpop.f32.mrf.mxu0
    %v204 = vadd.f32 %v178, %v203
    %205 = vmatmul.f32.gmra.mxu0 %v105
    %v206 = vpop.f32.mrf.mxu0
    %v207 = vadd.f32 %v178, %v206
    %208 = vmatmul.f32.gmra.mxu0 %v108
    %v209 = vpop.f32.mrf.mxu0
    %v210 = vadd.f32 %v178, %v209
    %211 = vmatmul.f32.gmra.mxu0 %v111
    %v212 = vpop.f32.mrf.mxu0
    %v213 = vadd.f32 %v178, %v212
    %214 = vmatmul.f32.gmra.mxu0 %v114
    %v215 = vpop.f32.mrf.mxu0
    %v216 = vadd.f32 %v178, %v215
    %217 = vmatmul.f32.gmra.mxu0 %v117
    %v218 = vpop.f32.mrf.mxu0
    %v219 = vadd.f32 %v178, %v218
    %220 = vdwg.mxu0
    %v221 = vtanh.pop %v198
    %v222 = vtanh.pop %v201
    %v223 = vtanh.pop %v204
    %v224 = vtanh.pop %v207
    %v225 = vtanh.pop %v210
    %v226 = vtanh.pop %v213
    %v227 = vtanh.pop %v216
    %v228 = vtanh.pop %v219
    %v229 = vld [vmem:[%s5] sm:$0x1]
    %v231 = vperm.slane %v229, 0
    %v233 = vmul.f32 %v221, %v231
    %v234 = vmul.f32 %v222, %v231
    %v235 = vmul.f32 %v223, %v231
    %v236 = vmul.f32 %v224, %v231
    %v237 = vmul.f32 %v225, %v231
    %v238 = vmul.f32 %v226, %v231
    %v239 = vmul.f32 %v227, %v231
    %v240 = vmul.f32 %v228, %v231
    %v241 = vsel %vm94, %v233, 0.0
    %242 = vadd.xlane.f32.xlu0 %v241
    %v243 = vpop.xlane.xlu0 %242
    %v244 = vsel %vm94, %v234, 0.0
    %245 = vadd.xlane.f32.xlu0 %v244
    %v246 = vpop.xlane.xlu0 %245
    %v247 = vsel %vm94, %v235, 0.0
    %248 = vadd.xlane.f32.xlu0 %v247
    %v249 = vpop.xlane.xlu0 %248
    %v250 = vsel %vm94, %v236, 0.0
    %251 = vadd.xlane.f32.xlu0 %v250
    %v252 = vpop.xlane.xlu0 %251
    %v253 = vsel %vm94, %v237, 0.0
    %254 = vadd.xlane.f32.xlu0 %v253
    %v255 = vpop.xlane.xlu0 %254
    %v256 = vsel %vm94, %v238, 0.0
    %257 = vadd.xlane.f32.xlu0 %v256
    %v258 = vpop.xlane.xlu0 %257
    %v259 = vsel %vm94, %v239, 0.0
    %260 = vadd.xlane.f32.xlu0 %v259
    %v261 = vpop.xlane.xlu0 %260
    %v262 = vsel %vm94, %v240, 0.0
    %263 = vadd.xlane.f32.xlu0 %v262
    %v264 = vpop.xlane.xlu0 %263
    %v265 = vsub.f32 0.0, %v243
    %v266 = vsub.f32 0.0, %v246
    %v267 = vsub.f32 0.0, %v249
    %v268 = vsub.f32 0.0, %v252
    %v269 = vsub.f32 0.0, %v255
    %v270 = vsub.f32 0.0, %v258
    %v271 = vsub.f32 0.0, %v261
    %v272 = vsub.f32 0.0, %v264
    %v273 = vmul.f32 %v265, 1.442695
    %v274 = vpow.pop %v273
    %v275 = vmul.f32 %v266, 1.442695
    %v276 = vpow.pop %v275
    %v277 = vmul.f32 %v267, 1.442695
    %v278 = vpow.pop %v277
    %v279 = vmul.f32 %v268, 1.442695
    %v280 = vpow.pop %v279
    %v281 = vmul.f32 %v269, 1.442695
    %v282 = vpow.pop %v281
    %v283 = vmul.f32 %v270, 1.442695
    %v284 = vpow.pop %v283
    %v285 = vmul.f32 %v271, 1.442695
    %v286 = vpow.pop %v285
    %v287 = vmul.f32 %v272, 1.442695
    %v288 = vpow.pop %v287
    %v289 = vadd.f32 %v274, 1.0
    %v290 = vadd.f32 %v276, 1.0
    %v291 = vadd.f32 %v278, 1.0
    %v292 = vadd.f32 %v280, 1.0
    %v293 = vadd.f32 %v282, 1.0
    %v294 = vadd.f32 %v284, 1.0
    %v295 = vadd.f32 %v286, 1.0
    %v296 = vadd.f32 %v288, 1.0
    %v297 = vrcp.pop %v289
    %v298 = vrcp.pop %v290
    %v299 = vrcp.pop %v291
    %v300 = vrcp.pop %v292
    %v301 = vrcp.pop %v293
    %v302 = vrcp.pop %v294
    %v303 = vrcp.pop %v295
    %v304 = vrcp.pop %v296
    %v305 = vld [vmem:[%s1] sm:$0xff]
    %v307 = vperm.slane %v305, 0
    %v308 = vlaneseq
    %v309 = vshrl.u32 %v308, 7
    %311 = vset.pattern.permute.xlu0 %v309
    %312 = vperm.xlu0 %311, %v307
    %v313 = vpop.permute.xlu0 %312
    %v314 = vperm.slane %v305, 1
    %v315 = vlaneseq
    %v316 = vshrl.u32 %v315, 7
    %318 = vset.pattern.permute.xlu0 %v316
    %319 = vperm.xlu0 %318, %v314
    %v320 = vpop.permute.xlu0 %319
    %v321 = vperm.slane %v305, 2
    %v322 = vlaneseq
    %v323 = vshrl.u32 %v322, 7
    %325 = vset.pattern.permute.xlu0 %v323
    %326 = vperm.xlu0 %325, %v321
    %v327 = vpop.permute.xlu0 %326
    %v328 = vperm.slane %v305, 3
    %v329 = vlaneseq
    %v330 = vshrl.u32 %v329, 7
    %332 = vset.pattern.permute.xlu0 %v330
    %333 = vperm.xlu0 %332, %v328
    %v334 = vpop.permute.xlu0 %333
    %v335 = vperm.slane %v305, 4
    %v336 = vlaneseq
    %v337 = vshrl.u32 %v336, 7
    %339 = vset.pattern.permute.xlu0 %v337
    %340 = vperm.xlu0 %339, %v335
    %v341 = vpop.permute.xlu0 %340
    %v342 = vperm.slane %v305, 5
    %v343 = vlaneseq
    %v344 = vshrl.u32 %v343, 7
    %346 = vset.pattern.permute.xlu0 %v344
    %347 = vperm.xlu0 %346, %v342
    %v348 = vpop.permute.xlu0 %347
    %v349 = vperm.slane %v305, 6
    %v350 = vlaneseq
    %v351 = vshrl.u32 %v350, 7
    %353 = vset.pattern.permute.xlu0 %v351
    %354 = vperm.xlu0 %353, %v349
    %v355 = vpop.permute.xlu0 %354
    %v356 = vperm.slane %v305, 7
    %v357 = vlaneseq
    %v358 = vshrl.u32 %v357, 7
    %360 = vset.pattern.permute.xlu0 %v358
    %361 = vperm.xlu0 %360, %v356
    %v362 = vpop.permute.xlu0 %361
    %v371 = vmul.f32 %v297, %v313
    %v372 = vmul.f32 %v298, %v320
    %v373 = vmul.f32 %v299, %v327
    %v374 = vmul.f32 %v300, %v334
    %v375 = vmul.f32 %v301, %v341
    %v376 = vmul.f32 %v302, %v348
    %v377 = vmul.f32 %v303, %v355
    %v378 = vmul.f32 %v304, %v362
    %387 = vset.pattern.permute.xlu0 0
    %388 = vperm.xlu0 %387, %v371
    %v389 = vpop.permute.xlu0 %388
    %390 = vset.pattern.permute.xlu0 0
    %391 = vperm.xlu0 %390, %v372
    %v392 = vpop.permute.xlu0 %391
    %393 = vset.pattern.permute.xlu0 0
    %394 = vperm.xlu0 %393, %v373
    %v395 = vpop.permute.xlu0 %394
    %396 = vset.pattern.permute.xlu0 0
    %397 = vperm.xlu0 %396, %v374
    %v398 = vpop.permute.xlu0 %397
    %399 = vset.pattern.permute.xlu0 0
    %400 = vperm.xlu0 %399, %v375
    %v401 = vpop.permute.xlu0 %400
    %402 = vset.pattern.permute.xlu0 0
    %403 = vperm.xlu0 %402, %v376
    %v404 = vpop.permute.xlu0 %403
    %405 = vset.pattern.permute.xlu0 0
    %406 = vperm.xlu0 %405, %v377
    %v407 = vpop.permute.xlu0 %406
    %408 = vset.pattern.permute.xlu0 0
    %409 = vperm.xlu0 %408, %v378
    %v410 = vpop.permute.xlu0 %409
    %v411 = vlaneseq
    %v412 = vand.u32 %v411, 127
    %v413 = vperm.slane %v389, %v412
    %v414 = vperm.slane %v392, %v412
    %v415 = vperm.slane %v395, %v412
    %v416 = vperm.slane %v398, %v412
    %v417 = vperm.slane %v401, %v412
    %v418 = vperm.slane %v404, %v412
    %v419 = vperm.slane %v407, %v412
    %v420 = vperm.slane %v410, %v412
    %vm421 = vcmask 1041409
    %v422 = vsel %vm421, %v414, %v413
    %vm423 = vcmask 1042434
    %v424 = vsel %vm423, %v415, %v422
    %vm425 = vcmask 1043459
    %v426 = vsel %vm425, %v416, %v424
    %vm427 = vcmask 1044484
    %v428 = vsel %vm427, %v417, %v426
    %vm429 = vcmask 1045509
    %v430 = vsel %vm429, %v418, %v428
    %vm431 = vcmask 1046534
    %v432 = vsel %vm431, %v419, %v430
    %vm433 = vcmask 1047559
    %v434 = vsel %vm433, %v420, %v432
    %vm436 = vcmask 64512
    %v437 = vsel %vm436, %v434, 0.0
    %438 = vadd.xlane.f32.xlu0 %v437
    %v439 = vpop.xlane.xlu0 %438
    %v440 = vrcp.pop %v439
    %v442 = vperm.slane %v440, 0
    %v443 = vperm.slane %v440, 1
    %v444 = vperm.slane %v440, 2
    %v445 = vperm.slane %v440, 3
    %v446 = vperm.slane %v440, 4
    %v447 = vperm.slane %v440, 5
    %v448 = vperm.slane %v440, 6
    %v449 = vperm.slane %v440, 7
    %v458 = vmul.f32 %v371, %v442
    %v459 = vmul.f32 %v372, %v443
    %v460 = vmul.f32 %v373, %v444
    %v461 = vmul.f32 %v374, %v445
    %v462 = vmul.f32 %v375, %v446
    %v463 = vmul.f32 %v376, %v447
    %v464 = vmul.f32 %v377, %v448
    %v465 = vmul.f32 %v378, %v449
    %474 = vset.pattern.permute.xlu0 0
    %475 = vperm.xlu0 %474, %v458
    %v476 = vpop.permute.xlu0 %475
    %477 = vset.pattern.permute.xlu0 0
    %478 = vperm.xlu0 %477, %v459
    %v479 = vpop.permute.xlu0 %478
    %480 = vset.pattern.permute.xlu0 0
    %481 = vperm.xlu0 %480, %v460
    %v482 = vpop.permute.xlu0 %481
    %483 = vset.pattern.permute.xlu0 0
    %484 = vperm.xlu0 %483, %v461
    %v485 = vpop.permute.xlu0 %484
    %486 = vset.pattern.permute.xlu0 0
    %487 = vperm.xlu0 %486, %v462
    %v488 = vpop.permute.xlu0 %487
    %489 = vset.pattern.permute.xlu0 0
    %490 = vperm.xlu0 %489, %v463
    %v491 = vpop.permute.xlu0 %490
    %492 = vset.pattern.permute.xlu0 0
    %493 = vperm.xlu0 %492, %v464
    %v494 = vpop.permute.xlu0 %493
    %495 = vset.pattern.permute.xlu0 0
    %496 = vperm.xlu0 %495, %v465
    %v497 = vpop.permute.xlu0 %496
    %v498 = vperm.slane %v476, %v412
    %v499 = vperm.slane %v479, %v412
    %v500 = vperm.slane %v482, %v412
    %v501 = vperm.slane %v485, %v412
    %v502 = vperm.slane %v488, %v412
    %v503 = vperm.slane %v491, %v412
    %v504 = vperm.slane %v494, %v412
    %v505 = vperm.slane %v497, %v412
    %v506 = vsel %vm421, %v499, %v498
    %v507 = vsel %vm423, %v500, %v506
    %v508 = vsel %vm425, %v501, %v507
    %v509 = vsel %vm427, %v502, %v508
    %v510 = vsel %vm429, %v503, %v509
    %v511 = vsel %vm431, %v504, %v510
    %v512 = vsel %vm433, %v505, %v511
    %514 = vst.msk [vmem:[#allocation9] sm:$0xff] %vm436, %v512
    %v515 = vld [vmem:[%s6] sm:$0xff]
    %517 = vset.pattern.permute.xlu0 0
    %518 = vperm.xlu0 %517, %v515
    %v519 = vpop.permute.xlu0 %518
    %v521 = vmul.f32 %v221, %v519
    %v522 = vmul.f32 %v222, %v519
    %v523 = vmul.f32 %v223, %v519
    %v524 = vmul.f32 %v224, %v519
    %v525 = vmul.f32 %v225, %v519
    %v526 = vmul.f32 %v226, %v519
    %v527 = vmul.f32 %v227, %v519
    %v528 = vmul.f32 %v228, %v519
    %v529 = vsel %vm94, %v521, 0.0
    %v530 = vrot.slane %v529, 4
    %v531 = vadd.f32 %v529, %v530
    %v532 = vrot.slane %v531, 2
    %v533 = vadd.f32 %v531, %v532
    %v534 = vrot.slane %v533, 1
    %v535 = vadd.f32 %v533, %v534
    %v536 = vsel %vm94, %v522, 0.0
    %v537 = vrot.slane %v536, 4
    %v538 = vadd.f32 %v536, %v537
    %v539 = vrot.slane %v538, 2
    %v540 = vadd.f32 %v538, %v539
    %v541 = vrot.slane %v540, 1
    %v542 = vadd.f32 %v540, %v541
    %v543 = vsel %vm94, %v523, 0.0
    %v544 = vrot.slane %v543, 4
    %v545 = vadd.f32 %v543, %v544
    %v546 = vrot.slane %v545, 2
    %v547 = vadd.f32 %v545, %v546
    %v548 = vrot.slane %v547, 1
    %v549 = vadd.f32 %v547, %v548
    %v550 = vsel %vm94, %v524, 0.0
    %v551 = vrot.slane %v550, 4
    %v552 = vadd.f32 %v550, %v551
    %v553 = vrot.slane %v552, 2
    %v554 = vadd.f32 %v552, %v553
    %v555 = vrot.slane %v554, 1
    %v556 = vadd.f32 %v554, %v555
    %v557 = vsel %vm94, %v525, 0.0
    %v558 = vrot.slane %v557, 4
    %v559 = vadd.f32 %v557, %v558
    %v560 = vrot.slane %v559, 2
    %v561 = vadd.f32 %v559, %v560
    %v562 = vrot.slane %v561, 1
    %v563 = vadd.f32 %v561, %v562
    %v564 = vsel %vm94, %v526, 0.0
    %v565 = vrot.slane %v564, 4
    %v566 = vadd.f32 %v564, %v565
    %v567 = vrot.slane %v566, 2
    %v568 = vadd.f32 %v566, %v567
    %v569 = vrot.slane %v568, 1
    %v570 = vadd.f32 %v568, %v569
    %v571 = vsel %vm94, %v527, 0.0
    %v572 = vrot.slane %v571, 4
    %v573 = vadd.f32 %v571, %v572
    %v574 = vrot.slane %v573, 2
    %v575 = vadd.f32 %v573, %v574
    %v576 = vrot.slane %v575, 1
    %v577 = vadd.f32 %v575, %v576
    %v578 = vsel %vm94, %v528, 0.0
    %v579 = vrot.slane %v578, 4
    %v580 = vadd.f32 %v578, %v579
    %v581 = vrot.slane %v580, 2
    %v582 = vadd.f32 %v580, %v581
    %v583 = vrot.slane %v582, 1
    %v584 = vadd.f32 %v582, %v583
    %v585 = vsub.f32 0.0, %v535
    %v586 = vsub.f32 0.0, %v542
    %v587 = vsub.f32 0.0, %v549
    %v588 = vsub.f32 0.0, %v556
    %v589 = vsub.f32 0.0, %v563
    %v590 = vsub.f32 0.0, %v570
    %v591 = vsub.f32 0.0, %v577
    %v592 = vsub.f32 0.0, %v584
    %v593 = vmul.f32 %v585, 1.442695
    %v594 = vpow.pop %v593
    %v595 = vmul.f32 %v586, 1.442695
    %v596 = vpow.pop %v595
    %v597 = vmul.f32 %v587, 1.442695
    %v598 = vpow.pop %v597
    %v599 = vmul.f32 %v588, 1.442695
    %v600 = vpow.pop %v599
    %v601 = vmul.f32 %v589, 1.442695
    %v602 = vpow.pop %v601
    %v603 = vmul.f32 %v590, 1.442695
    %v604 = vpow.pop %v603
    %v605 = vmul.f32 %v591, 1.442695
    %v606 = vpow.pop %v605
    %v607 = vmul.f32 %v592, 1.442695
    %v608 = vpow.pop %v607
    %v609 = vadd.f32 %v594, 1.0
    %v610 = vadd.f32 %v596, 1.0
    %v611 = vadd.f32 %v598, 1.0
    %v612 = vadd.f32 %v600, 1.0
    %v613 = vadd.f32 %v602, 1.0
    %v614 = vadd.f32 %v604, 1.0
    %v615 = vadd.f32 %v606, 1.0
    %v616 = vadd.f32 %v608, 1.0
    %v617 = vrcp.pop %v609
    %v618 = vrcp.pop %v610
    %v619 = vrcp.pop %v611
    %v620 = vrcp.pop %v612
    %v621 = vrcp.pop %v613
    %v622 = vrcp.pop %v614
    %v623 = vrcp.pop %v615
    %v624 = vrcp.pop %v616
    %v633 = vsel %vm421, %v618, %v617
    %v634 = vsel %vm423, %v619, %v633
    %v635 = vsel %vm425, %v620, %v634
    %v636 = vsel %vm427, %v621, %v635
    %v637 = vsel %vm429, %v622, %v636
    %v638 = vsel %vm431, %v623, %v637
    %v639 = vsel %vm433, %v624, %v638
    %641 = vst.msk [vmem:[#allocation11] sm:$0xff] %vm94, %v639
    // Predicated region
    $region42: #{tpu_custom_call.1} parent=1 // pred_check
      _
    $region43: #{tpu_custom_call.1} parent=1 // pred_check_branch
      %643 = sbr.rel (0) target = $region45
    $region44: #{tpu_custom_call.1} parent=1 // pred_region
      %645 = vsyncadd [#allocation4], 0
      %s646 = sshll.u32 [#allocation8], 4
      %s647 = int_to_ptr.vmem [resolvable:$true] %s646
      %s648 = sshll.u32 %s7, 4
      %s649 = int_to_ptr.hbm [resolvable:$true] %s648
      %654 = dma.vmem_to_hbm [thread:$0]  %s647, 1024, %s649, [#allocation4], 128, 128, 8
    $region45: #{tpu_custom_call.1} parent=1 // pred_fallthru
      _
    // Predicated region
    $region46: #{tpu_custom_call.1} parent=1 // pred_check
      _
    $region47: #{tpu_custom_call.1} parent=1 // pred_check_branch
      %656 = sbr.rel (0) target = $region49
    $region48: #{tpu_custom_call.1} parent=1 // pred_region
      %658 = vsyncadd [#allocation10], 0
      %s660 = sshll.u32 [#allocation9], 4
      %s661 = int_to_ptr.vmem [resolvable:$true] %s660
      %s662 = sshll.u32 %s8, 4
      %s663 = int_to_ptr.hbm [resolvable:$true] %s662
      %665 = dma.vmem_to_hbm [thread:$0]  %s661, 128, %s663, [#allocation10]
    $region49: #{tpu_custom_call.1} parent=1 // pred_fallthru
      _
    // Predicated region
    $region50: #{tpu_custom_call.1} parent=1 // pred_check
      _
    $region51: #{tpu_custom_call.1} parent=1 // pred_check_branch
      %667 = sbr.rel (0) target = $region53
    $region52: #{tpu_custom_call.1} parent=1 // pred_region
      %669 = vsyncadd [#allocation10], 0
      %s671 = sshll.u32 [#allocation11], 4
      %s672 = int_to_ptr.vmem [resolvable:$true] %s671
      %s673 = sshll.u32 %s9, 4
      %s674 = int_to_ptr.hbm [resolvable:$true] %s673
      %676 = dma.vmem_to_hbm [thread:$0]  %s672, 128, %s674, [#allocation10]
    $region53: #{tpu_custom_call.1} parent=1 // pred_fallthru
      _
    // Predicated region
    $region54: #{tpu_custom_call.1} parent=1 // pred_check
      _
    $region55: #{tpu_custom_call.1} parent=1 // pred_check_branch
      %678 = sbr.rel (0) target = $region57
    $region56: #{tpu_custom_call.1} parent=1 // pred_region
      %680 = dma.done [#allocation4], 1024
    $region57: #{tpu_custom_call.1} parent=1 // pred_fallthru
      _
    // Predicated region
    $region58: #{tpu_custom_call.1} parent=1 // pred_check
      _
    $region59: #{tpu_custom_call.1} parent=1 // pred_check_branch
      %682 = sbr.rel (0) target = $region61
    $region60: #{tpu_custom_call.1} parent=1 // pred_region
      %684 = dma.done [#allocation10], 128
    $region61: #{tpu_custom_call.1} parent=1 // pred_fallthru
      _
    // Predicated region
    $region62: #{tpu_custom_call.1} parent=1 // pred_check
      _
    $region63: #{tpu_custom_call.1} parent=1 // pred_check_branch
      %686 = sbr.rel (0) target = $region65
    $region64: #{tpu_custom_call.1} parent=1 // pred_region
      %688 = dma.done [#allocation10], 128
    $region65: #{tpu_custom_call.1} parent=1 // pred_fallthru
      _
    %689 = vsyncpa [#allocation3], 1
    %690 = vsyncpa [#allocation6], 1
    %691 = vsyncpa [#allocation4], 1
    %692 = vsyncpa [#allocation10], 1

</llo_original>
